<compile_context>
chip_gen: v7x
topology: tpu7x:2x2x1
jax: 0.10.0
libtpu: 0.0.40
codegen_flags: <defaults>
</compile_context>

<pallas_src>
import functools

import jax
import jax.numpy as jnp
from jax.experimental import pallas as pl
from jax.experimental.pallas import tpu as pltpu


def _round_up(a: int, b: int) -> int:
    return ((a + b - 1) // b) * b


def _binary_linear_kernel(x_ref, w_ref, b_ref, o_ref, acc_ref, *, compute_dtype):
    k = pl.program_id(2)

    @pl.when(k == 0)
    def _init():
        acc_ref[...] = jnp.zeros_like(acc_ref)

    # Binarize in f32 (VPU compare/select is f32-safe on v5e), then cast.
    # {0, 1} is exact in bf16, so the weight-side cast is lossless.
    w_bin = jnp.where(w_ref[...] > 0, 1.0, 0.0).astype(compute_dtype)
    x = x_ref[...].astype(compute_dtype)

    # NT matmul: contract the K (last, lane-mapped) axis of both operands
    # directly on the MXU -- no materialized w_bin.T.
    acc_ref[...] += jax.lax.dot_general(
        x,
        w_bin,
        dimension_numbers=(((1,), (1,)), ((), ())),
        preferred_element_type=jnp.float32,
    )

    @pl.when(k == pl.num_programs(2) - 1)
    def _finalize():
        o_ref[...] = (acc_ref[...] + b_ref[...].astype(jnp.float32)).astype(o_ref.dtype)


def binary_linear(x, weight, bias=None, *, tm=256, tn=256, tk=512,
                  compute_dtype=jnp.float32):
    """x: [M, K], weight: [N, K], bias: [N] or None -> [M, N] (x.dtype)."""
    M, K = x.shape
    N, K2 = weight.shape
    assert K == K2, "in_features mismatch"

    if bias is None:
        # TODO(synk): the module's bias=False branch references an undefined
        # `self.binary_weight`; we implement it as the same binarized matmul
        # with a zero bias.
        bias = jnp.zeros((N,), x.dtype)

    # Clamp tiles to the (padded) problem size; keep sublane/lane alignment.
    tm = min(tm, _round_up(M, 8))
    tn = min(tn, _round_up(N, 128))
    tk = min(tk, _round_up(K, 128))

    Mp, Np, Kp = _round_up(M, tm), _round_up(N, tn), _round_up(K, tk)

    x_p = jnp.pad(x, ((0, Mp - M), (0, Kp - K))) if (Mp, Kp) != (M, K) else x
    w_p = (jnp.pad(weight, ((0, Np - N), (0, Kp - K)))
           if (Np, Kp) != (N, K) else weight)
    b_p = jnp.pad(bias, (0, Np - N)) if Np != N else bias
    b_p = b_p.reshape(1, Np)

    grid = (Mp // tm, Np // tn, Kp // tk)
    kernel = functools.partial(_binary_linear_kernel, compute_dtype=compute_dtype)

    itemsize = jnp.dtype(x.dtype).itemsize
    cost = pl.CostEstimate(
        flops=2 * M * N * K,
        transcendentals=0,
        bytes_accessed=(x.size + weight.size + bias.size + M * N) * itemsize,
    )

    out = pl.pallas_call(
        kernel,
        out_shape=jax.ShapeDtypeStruct((Mp, Np), x.dtype),
        grid_spec=pltpu.PrefetchScalarGridSpec(
            num_scalar_prefetch=0,
            grid=grid,
            in_specs=[
                pl.BlockSpec((tm, tk), lambda i, j, k: (i, k)),   # x tile
                pl.BlockSpec((tn, tk), lambda i, j, k: (j, k)),   # weight tile
                pl.BlockSpec((1, tn), lambda i, j, k: (0, j)),    # bias tile
            ],
            out_specs=pl.BlockSpec((tm, tn), lambda i, j, k: (i, j)),
            scratch_shapes=[pltpu.VMEM((tm, tn), jnp.float32)],
        ),
        compiler_params=pltpu.CompilerParams(
            dimension_semantics=("parallel", "parallel", "arbitrary"),
        ),
        cost_estimate=cost,
    )(x_p, w_p, b_p)

    return out[:M, :N]


if __name__ == "__main__":
    key = jax.random.PRNGKey(0)
    k_x, k_w = jax.random.split(key)

    batch = 8
    in_features = 32
    out_features = 16

    # Mirror the module's __init__: weight ~ U(-1, 1) of shape (out, in),
    # bias = zeros(out).
    weight = jax.random.uniform(
        k_w, (out_features, in_features), jnp.float32, minval=-1.0, maxval=1.0
    )
    bias = jnp.zeros((out_features,), jnp.float32)
    x = jax.random.normal(k_x, (batch, in_features), jnp.float32)

    # Pure-JAX reference of the exact PyTorch semantics.
    w_bin_ref = jnp.sign(jnp.maximum(weight, 0.0))
    ref = x @ w_bin_ref.T + bias

    # f32 compute path (bit-for-bit precision vs reference).
    out_f32 = jax.block_until_ready(binary_linear(x, weight, bias))
    assert out_f32.shape == (batch, out_features)
    assert jnp.allclose(out_f32, ref, atol=1e-5, rtol=1e-5), "f32 mismatch vs reference"

    # bf16 compute path (native MXU rate; weight side lossless, x cast is the
    # only precision trade-off).
    out_bf16 = jax.block_until_ready(
        binary_linear(x, weight, bias, compute_dtype=jnp.bfloat16)
    )
    assert jnp.allclose(out_bf16, ref, atol=5e-2, rtol=5e-2), "bf16 mismatch vs reference"

    print("KERNEL_OK")
</pallas_src>

<mosaic_0001>
module attributes {stable_mosaic.version = 11 : i64} {
  func.func @_binary_linear_kernel(%arg0: i32, %arg1: i32, %arg2: i32, %arg3: memref<8x128xf32, #tpu.memory_space<vmem>>, %arg4: memref<128x128xf32, #tpu.memory_space<vmem>>, %arg5: memref<1x128xf32, #tpu.memory_space<vmem>>, %arg6: memref<8x128xf32, #tpu.memory_space<vmem>>, %arg7: memref<8x128xf32, #tpu.memory_space<vmem>>) attributes {dimension_semantics = [#tpu.dimension_semantics<parallel>, #tpu.dimension_semantics<parallel>, #tpu.dimension_semantics<arbitrary>], iteration_bounds = array<i64: 1, 1, 1>, scalar_prefetch = 0 : i64, scratch_operands = 1 : i64, tpu.core_type = #tpu.core_type<tc>, window_params = [{transform_indices = @transform_0, window_bounds = array<i64: 8, 128>}, {transform_indices = @transform_1, window_bounds = array<i64: 128, 128>}, {transform_indices = @transform_2, window_bounds = array<i64: 1, 128>}, {transform_indices = @transform_3, window_bounds = array<i64: 8, 128>}]} {
    %c0_i32 = arith.constant 0 : i32
    %0 = arith.cmpi eq, %arg2, %c0_i32 : i32
    %1 = arith.extui %0 : i1 to i32
    %c0_i32_0 = arith.constant 0 : i32
    %2 = arith.cmpi ne, %1, %c0_i32_0 : i32
    scf.if %2 {
      %cst_13 = arith.constant 0.000000e+00 : f32
      %17 = vector.broadcast %cst_13 : f32 to vector<8x128xf32>
      %c0_14 = arith.constant 0 : index
      %c0_15 = arith.constant 0 : index
      %18 = vector.load %arg7[%c0_14, %c0_15] : memref<8x128xf32, #tpu.memory_space<vmem>>, vector<8x128xf32>
      tpu.vector_store %arg7[%c0_14, %c0_15], %17 {strides = array<i32>} : memref<8x128xf32, #tpu.memory_space<vmem>>, vector<8x128xf32>,
    } else {
    }
    %c0 = arith.constant 0 : index
    %c0_1 = arith.constant 0 : index
    %3 = vector.load %arg4[%c0, %c0_1] : memref<128x128xf32, #tpu.memory_space<vmem>>, vector<128x128xf32>
    %cst = arith.constant 0.000000e+00 : f32
    %4 = vector.broadcast %cst : f32 to vector<128x128xf32>
    %5 = arith.cmpf ogt, %3, %4 : vector<128x128xf32>
    %cst_2 = arith.constant 1.000000e+00 : f32
    %cst_3 = arith.constant 0.000000e+00 : f32
    %6 = vector.broadcast %cst_2 : f32 to vector<128x128xf32>
    %7 = vector.broadcast %cst_3 : f32 to vector<128x128xf32>
    %8 = arith.select %5, %6, %7 : vector<128x128xi1>, vector<128x128xf32>
    %c0_4 = arith.constant 0 : index
    %c0_5 = arith.constant 0 : index
    %9 = vector.load %arg3[%c0_4, %c0_5] : memref<8x128xf32, #tpu.memory_space<vmem>>, vector<8x128xf32>
    %c0_6 = arith.constant 0 : index
    %c0_7 = arith.constant 0 : index
    %10 = vector.load %arg7[%c0_6, %c0_7] : memref<8x128xf32, #tpu.memory_space<vmem>>, vector<8x128xf32>
    %cst_8 = arith.constant dense<0.000000e+00> : vector<8x128xf32>
    %11 = tpu.matmul %9, %8, %cst_8 {dimension_numbers = #tpu.dot_dimension_numbers<[1], [1], [0], [0], [0, 0, 1, 0], [], []>} : vector<8x128xf32>, vector<128x128xf32>, vector<8x128xf32> -> vector<8x128xf32>
    %12 = arith.addf %10, %11 : vector<8x128xf32>
    %c0_9 = arith.constant 0 : index
    %c0_10 = arith.constant 0 : index
    %13 = vector.load %arg7[%c0_9, %c0_10] : memref<8x128xf32, #tpu.memory_space<vmem>>, vector<8x128xf32>
    tpu.vector_store %arg7[%c0_9, %c0_10], %12 {strides = array<i32>} : memref<8x128xf32, #tpu.memory_space<vmem>>, vector<8x128xf32>,
    %c0_i32_11 = arith.constant 0 : i32
    %14 = arith.cmpi eq, %arg2, %c0_i32_11 : i32
    %15 = arith.extui %14 : i1 to i32
    %c0_i32_12 = arith.constant 0 : i32
    %16 = arith.cmpi ne, %15, %c0_i32_12 : i32
    scf.if %16 {
      %c0_13 = arith.constant 0 : index
      %c0_14 = arith.constant 0 : index
      %17 = vector.load %arg7[%c0_13, %c0_14] : memref<8x128xf32, #tpu.memory_space<vmem>>, vector<8x128xf32>
      %c0_15 = arith.constant 0 : index
      %c0_16 = arith.constant 0 : index
      %18 = vector.load %arg5[%c0_15, %c0_16] : memref<1x128xf32, #tpu.memory_space<vmem>>, vector<1x128xf32>
      %19 = vector.broadcast %18 : vector<1x128xf32> to vector<8x128xf32>
      %20 = arith.addf %17, %19 : vector<8x128xf32>
      %c0_17 = arith.constant 0 : index
      %c0_18 = arith.constant 0 : index
      %21 = vector.load %arg6[%c0_17, %c0_18] : memref<8x128xf32, #tpu.memory_space<vmem>>, vector<8x128xf32>
      tpu.vector_store %arg6[%c0_17, %c0_18], %20 {strides = array<i32>} : memref<8x128xf32, #tpu.memory_space<vmem>>, vector<8x128xf32>,
    } else {
    }
    return
  }
  func.func @transform_0(%arg0: i32, %arg1: i32, %arg2: i32) -> (i32, i32) {
    %c0_i32 = arith.constant 0 : i32
    return %arg0, %arg2 : i32, i32
  }
  func.func @transform_1(%arg0: i32, %arg1: i32, %arg2: i32) -> (i32, i32) {
    %c0_i32 = arith.constant 0 : i32
    return %arg1, %arg2 : i32, i32
  }
  func.func @transform_2(%arg0: i32, %arg1: i32, %arg2: i32) -> (i32, i32) {
    %c0_i32 = arith.constant 0 : i32
    %c0_i32_0 = arith.constant 0 : i32
    return %c0_i32, %arg1 : i32, i32
  }
  func.func @transform_3(%arg0: i32, %arg1: i32, %arg2: i32) -> (i32, i32) {
    %c0_i32 = arith.constant 0 : i32
    return %arg0, %arg1 : i32, i32
  }
}

</mosaic_0001>

<llo_original>
// kernel: tpu_custom_call.1
$region0: #{tpu_custom_call.1}
  #allocation0 [shape = 'u32[]', space=smem, size = 0x4, offset = 0x4, fixed_abs, tag = 'smem constant byte address 0x4 - core index']
  #allocation1 [shape = 'u32[144,128]{1,0:T(1,128)}', space=vmem, size = 0x12000, scoped, tag = 'internal scratch']
  #allocation2 [shape = 'f32[8,128]{1,0:T(8,128)}', space=vmem, size = 0x1000, scoped, tag = 'scratch operand']
  %s0 = inlined_call_operand.hbm [shape: f32[8,128], index: 0, kind: input, shape index: {}]
  %s1 = inlined_call_operand.hbm [shape: f32[128,128], index: 1, kind: input, shape index: {}]
  %s2 = inlined_call_operand.vmem [shape: f32[1,128], index: 2, kind: input, shape index: {}]
  %s3 = inlined_call_operand.hbm [shape: f32[8,128], index: 3, kind: output, shape index: {}]
  %s4 = sld [smem:[#allocation0]]
  $region38: #{tpu_custom_call.1} parent=0
    _
  %s6 = ssub.s32 1, %s4
  %s7 = scalar_select 0, %s6, %s4
  $region1: #{tpu_custom_call.1} parent=0
    #allocation3 [shape = 'u8[4096]{0}', space=vmem, size = 0x1000, scoped, tag = 'input window, operand 0, single buffered']
    #allocation4 [shape = 's32[1]{0}', space=sflag, size = 0x4, scoped, tag = 'scoped memory for tpu_custom_call.1']
    #allocation5 [shape = 's32[1]{0}', space=sflag, size = 0x4, scoped, tag = 'scoped memory for tpu_custom_call.1']
    #allocation6 [shape = 'u8[65536]{0}', space=vmem, size = 0x10000, scoped, tag = 'input window, operand 1, single buffered']
    #allocation7 [shape = 's32[1]{0}', space=sflag, size = 0x4, scoped, tag = 'scoped memory for tpu_custom_call.1']
    #allocation8 [shape = 'u8[4096]{0}', space=vmem, size = 0x1000, scoped, tag = 'output window, operand 0, single buffered']
    %8 = vsyncpa [#allocation4], 0
    %9 = vsyncpa [#allocation7], 0
    %10 = vsyncpa [#allocation5], 0
    // Predicated region
    $region2: #{tpu_custom_call.1} parent=1 // pred_check
      _
    $region3: #{tpu_custom_call.1} parent=1 // pred_check_branch
      %12 = sbr.rel (0) target = $region5
    $region4: #{tpu_custom_call.1} parent=1 // pred_region
      %s14 = ssub.s32 128, 128
      %15 = vsyncadd [#allocation4], %s14
      %s17 = sshll.u32 [#allocation3], 4
      %s18 = int_to_ptr.vmem [resolvable:$true] %s17
      %20 = dma.hbm_to_vmem [thread:$0]  %s0, 128, %s18, [#allocation4]
    $region5: #{tpu_custom_call.1} parent=1 // pred_fallthru
      _
    // Predicated region
    $region6: #{tpu_custom_call.1} parent=1 // pred_check
      _
    $region7: #{tpu_custom_call.1} parent=1 // pred_check_branch
      %22 = sbr.rel (0) target = $region9
    $region8: #{tpu_custom_call.1} parent=1 // pred_region
      %s24 = ssub.s32 2048, 2048
      %25 = vsyncadd [#allocation7], %s24
      %s26 = sshll.u32 [#allocation6], 4
      %s27 = int_to_ptr.vmem [resolvable:$true] %s26
      %32 = dma.hbm_to_vmem [thread:$0]  %s1, 2048, %s27, [#allocation7], 128, 128, 8
    $region9: #{tpu_custom_call.1} parent=1 // pred_fallthru
      _
    // Predicated region
    $region10: #{tpu_custom_call.1} parent=1 // pred_check
      _
    $region11: #{tpu_custom_call.1} parent=1 // pred_check_branch
      %34 = sbr.rel (0) target = $region13
    $region12: #{tpu_custom_call.1} parent=1 // pred_region
      _
    $region13: #{tpu_custom_call.1} parent=1 // pred_fallthru
      _
    // Predicated region
    $region14: #{tpu_custom_call.1} parent=1 // pred_check
      _
    $region15: #{tpu_custom_call.1} parent=1 // pred_check_branch
      %36 = sbr.rel (0) target = $region17
    $region16: #{tpu_custom_call.1} parent=1 // pred_region
      %37 = dma.done [#allocation4], 128
    $region17: #{tpu_custom_call.1} parent=1 // pred_fallthru
      _
    // Predicated region
    $region18: #{tpu_custom_call.1} parent=1 // pred_check
      _
    $region19: #{tpu_custom_call.1} parent=1 // pred_check_branch
      %39 = sbr.rel (0) target = $region21
    $region20: #{tpu_custom_call.1} parent=1 // pred_region
      %40 = dma.done [#allocation7], 2048
    $region21: #{tpu_custom_call.1} parent=1 // pred_fallthru
      _
    %p41 = scmp.eq.s32.totalorder 0, 0
    // Predicated region
    $region22: #{tpu_custom_call.1} parent=1 // pred_check
      %p42 = pneg %p41
    $region23: #{tpu_custom_call.1} parent=1 // pred_check_branch
      %44 = sbr.rel (%p42) target = $region25
    $region24: #{tpu_custom_call.1} parent=1 // pred_region
      %45 = vst [vmem:[#allocation2] sm:$0xff] 0.0
    $region25: #{tpu_custom_call.1} parent=1 // pred_fallthru
      _
    %v46 = vld [vmem:[#allocation6] sm:$0xff]
    %v47 = vld [vmem:[#allocation6 + $0x8] sm:$0xff]
    %v48 = vld [vmem:[#allocation6 + $0x10] sm:$0xff]
    %v49 = vld [vmem:[#allocation6 + $0x18] sm:$0xff]
    %v50 = vld [vmem:[#allocation6 + $0x20] sm:$0xff]
    %v51 = vld [vmem:[#allocation6 + $0x28] sm:$0xff]
    %v52 = vld [vmem:[#allocation6 + $0x30] sm:$0xff]
    %v53 = vld [vmem:[#allocation6 + $0x38] sm:$0xff]
    %v54 = vld [vmem:[#allocation6 + $0x40] sm:$0xff]
    %v55 = vld [vmem:[#allocation6 + $0x48] sm:$0xff]
    %v56 = vld [vmem:[#allocation6 + $0x50] sm:$0xff]
    %v57 = vld [vmem:[#allocation6 + $0x58] sm:$0xff]
    %v58 = vld [vmem:[#allocation6 + $0x60] sm:$0xff]
    %v59 = vld [vmem:[#allocation6 + $0x68] sm:$0xff]
    %v60 = vld [vmem:[#allocation6 + $0x70] sm:$0xff]
    %v61 = vld [vmem:[#allocation6 + $0x78] sm:$0xff]
    %vm62 = vcmp.gt.f32.partialorder %v46, 0.0
    %vm63 = vcmp.gt.f32.partialorder %v47, 0.0
    %vm64 = vcmp.gt.f32.partialorder %v48, 0.0
    %vm65 = vcmp.gt.f32.partialorder %v49, 0.0
    %vm66 = vcmp.gt.f32.partialorder %v50, 0.0
    %vm67 = vcmp.gt.f32.partialorder %v51, 0.0
    %vm68 = vcmp.gt.f32.partialorder %v52, 0.0
    %vm69 = vcmp.gt.f32.partialorder %v53, 0.0
    %vm70 = vcmp.gt.f32.partialorder %v54, 0.0
    %vm71 = vcmp.gt.f32.partialorder %v55, 0.0
    %vm72 = vcmp.gt.f32.partialorder %v56, 0.0
    %vm73 = vcmp.gt.f32.partialorder %v57, 0.0
    %vm74 = vcmp.gt.f32.partialorder %v58, 0.0
    %vm75 = vcmp.gt.f32.partialorder %v59, 0.0
    %vm76 = vcmp.gt.f32.partialorder %v60, 0.0
    %vm77 = vcmp.gt.f32.partialorder %v61, 0.0
    %v78 = vsel %vm62, 1.0, 0.0
    %v79 = vsel %vm63, 1.0, 0.0
    %v80 = vsel %vm64, 1.0, 0.0
    %v81 = vsel %vm65, 1.0, 0.0
    %v82 = vsel %vm66, 1.0, 0.0
    %v83 = vsel %vm67, 1.0, 0.0
    %v84 = vsel %vm68, 1.0, 0.0
    %v85 = vsel %vm69, 1.0, 0.0
    %v86 = vsel %vm70, 1.0, 0.0
    %v87 = vsel %vm71, 1.0, 0.0
    %v88 = vsel %vm72, 1.0, 0.0
    %v89 = vsel %vm73, 1.0, 0.0
    %v90 = vsel %vm74, 1.0, 0.0
    %v91 = vsel %vm75, 1.0, 0.0
    %v92 = vsel %vm76, 1.0, 0.0
    %v93 = vsel %vm77, 1.0, 0.0
    %v94 = vld [vmem:[#allocation3] sm:$0xff]
    %v95 = vld [vmem:[#allocation2] sm:$0xff]
    %96 = vmatprep.subr.mxu0 0.0
    %97 = vmatpush1.xpose.msra.mxu0 %v78
    %98 = vmatprep.subr.mxu0 0.0
    %99 = vmatpush1.xpose.msra.mxu0 %v79
    %100 = vmatprep.subr.mxu0 0.0
    %101 = vmatpush1.xpose.msra.mxu0 %v80
    %102 = vmatprep.subr.mxu0 0.0
    %103 = vmatpush1.xpose.msra.mxu0 %v81
    %104 = vmatprep.subr.mxu0 0.0
    %105 = vmatpush1.xpose.msra.mxu0 %v82
    %106 = vmatprep.subr.mxu0 0.0
    %107 = vmatpush1.xpose.msra.mxu0 %v83
    %108 = vmatprep.subr.mxu0 0.0
    %109 = vmatpush1.xpose.msra.mxu0 %v84
    %110 = vmatprep.subr.mxu0 0.0
    %111 = vmatpush1.xpose.msra.mxu0 %v85
    %112 = vmatprep.subr.mxu0 0.0
    %113 = vmatpush1.xpose.msra.mxu0 %v86
    %114 = vmatprep.subr.mxu0 0.0
    %115 = vmatpush1.xpose.msra.mxu0 %v87
    %116 = vmatprep.subr.mxu0 0.0
    %117 = vmatpush1.xpose.msra.mxu0 %v88
    %118 = vmatprep.subr.mxu0 0.0
    %119 = vmatpush1.xpose.msra.mxu0 %v89
    %120 = vmatprep.subr.mxu0 0.0
    %121 = vmatpush1.xpose.msra.mxu0 %v90
    %122 = vmatprep.subr.mxu0 0.0
    %123 = vmatpush1.xpose.msra.mxu0 %v91
    %124 = vmatprep.subr.mxu0 0.0
    %125 = vmatpush1.xpose.msra.mxu0 %v92
    %126 = vmatprep.subr.mxu0 0.0
    %127 = vmatpush1.xpose.msra.mxu0 %v93
    %128 = vmatprep.subr.mxu0 0.0
    %129 = vmatpush1.xpose.msra.mxu0 0.0
    %130 = vmatprep.subr.mxu0 0.0
    %131 = vmatpush1.xpose.msra.mxu0 0.0
    %132 = vmatprep.subr.mxu0 0.0
    %133 = vmatpush1.xpose.msra.mxu0 0.0
    %134 = vmatprep.subr.mxu0 0.0
    %135 = vmatpush1.xpose.msra.mxu0 0.0
    %136 = vmatprep.subr.mxu0 0.0
    %137 = vmatpush1.xpose.msra.mxu0 0.0
    %138 = vmatprep.subr.mxu0 0.0
    %139 = vmatpush1.xpose.msra.mxu0 0.0
    %140 = vmatprep.subr.mxu0 0.0
    %141 = vmatpush1.xpose.msra.mxu0 0.0
    %142 = vmatprep.subr.mxu0 0.0
    %143 = vmatpush1.xpose.msra.mxu0 0.0
    %144 = vmatprep.subr.mxu0 0.0
    %145 = vmatpush1.xpose.msra.mxu0 0.0
    %146 = vmatprep.subr.mxu0 0.0
    %147 = vmatpush1.xpose.msra.mxu0 0.0
    %148 = vmatprep.subr.mxu0 0.0
    %149 = vmatpush1.xpose.msra.mxu0 0.0
    %150 = vmatprep.subr.mxu0 0.0
    %151 = vmatpush1.xpose.msra.mxu0 0.0
    %152 = vmatprep.subr.mxu0 0.0
    %153 = vmatpush1.xpose.msra.mxu0 0.0
    %154 = vmatprep.subr.mxu0 0.0
    %155 = vmatpush1.xpose.msra.mxu0 0.0
    %156 = vmatprep.subr.mxu0 0.0
    %157 = vmatpush1.xpose.msra.mxu0 0.0
    %158 = vmatprep.subr.mxu0 0.0
    %159 = vmatpush1.xpose.msra.mxu0 0.0
    %160 = vmatprep.mubr.f32.mxu0 0.0
    %161 = vmatmul.mubr.f32.gmra.mrb[0].mxu0 %v94
    %v162 = vpop.f32.mrb[0].mxu0
    %v163 = vadd.f32 0.0, %v162
    %v164 = vpop.f32.mrb[0].mxu0
    %165 = vdwg.mxu0
    %v166 = vadd.f32 %v95, %v163
    %167 = vst [vmem:[#allocation2] sm:$0xff] %v166
    // Predicated region
    $region26: #{tpu_custom_call.1} parent=1 // pred_check
      %p168 = pneg %p41
    $region27: #{tpu_custom_call.1} parent=1 // pred_check_branch
      %170 = sbr.rel (%p168) target = $region29
    $region28: #{tpu_custom_call.1} parent=1 // pred_region
      %v171 = vld [vmem:[#allocation2] sm:$0xff]
      %v172 = vld [vmem:[%s2] sm:$0x1]
      %v174 = vlaneseq
      %v175 = vshrl.u32 %v174, 7
      %v176 = vsub.s32 0, %v175
      %v177 = vrot.slane %v172, %v176
      %v179 = vadd.f32 %v171, %v177
      %180 = vst [vmem:[#allocation8] sm:$0xff] %v179
    $region29: #{tpu_custom_call.1} parent=1 // pred_fallthru
      _
    // Predicated region
    $region30: #{tpu_custom_call.1} parent=1 // pred_check
      _
    $region31: #{tpu_custom_call.1} parent=1 // pred_check_branch
      %182 = sbr.rel (0) target = $region33
    $region32: #{tpu_custom_call.1} parent=1 // pred_region
      %s184 = ssub.s32 128, 128
      %185 = vsyncadd [#allocation5], %s184
      %s187 = sshll.u32 [#allocation8], 4
      %s188 = int_to_ptr.vmem [resolvable:$true] %s187
      %190 = dma.vmem_to_hbm [thread:$0]  %s188, 128, %s3, [#allocation5]
    $region33: #{tpu_custom_call.1} parent=1 // pred_fallthru
      _
    // Predicated region
    $region34: #{tpu_custom_call.1} parent=1 // pred_check
      _
    $region35: #{tpu_custom_call.1} parent=1 // pred_check_branch
      %192 = sbr.rel (0) target = $region37
    $region36: #{tpu_custom_call.1} parent=1 // pred_region
      %193 = dma.done [#allocation5], 128
    $region37: #{tpu_custom_call.1} parent=1 // pred_fallthru
      _
    %194 = vsyncpa [#allocation4], 1
    %195 = vsyncpa [#allocation7], 1
    %196 = vsyncpa [#allocation5], 1

</llo_original>
